<compile_context>
chip_gen: v6e
topology: v6e:2x2x1
jax: 0.10.0
libtpu: 0.0.40
codegen_flags: <defaults>
</compile_context>

<pallas_src>
import math

import jax
import jax.numpy as jnp
from jax import lax
from jax.experimental import pallas as pl
from jax.experimental.pallas import tpu as pltpu


def _cdiv(a, b):
    return -(-a // b)


def _round_up(a, b):
    return _cdiv(a, b) * b


def _fourier_kernel(w_ref, phase_ref, x_ref, o_ref):
    # w_ref    : (2G, 128) selection * (2*pi*b) coefficients; lane l belongs to
    #            feature l % n_feat of in-row sample l // n_feat.
    # phase_ref: (1, 128)  0.0 for sin lanes, pi/2 for cos lanes.
    # x_ref    : (TR, 2G)  row-major packed coordinate pairs, G samples per row.
    # o_ref    : (TR, 128) row-major packed features (128-lane unmasked stores).
    arg = jnp.dot(
        x_ref[...],
        w_ref[...],
        precision=lax.Precision.HIGHEST,       # keep full f32 accuracy on the MXU
        preferred_element_type=jnp.float32,
    )
    arg = arg + phase_ref[...]                 # (1,128) broadcast over sublanes
    o_ref[...] = jnp.sin(arg).astype(o_ref.dtype)   # cos(x) == sin(x + pi/2)


def fourier_feature_embed(x, b, pos_cols, *, tile_rows=4096, use_pallas=None):
    """JAX/Pallas equivalent of FourierFeatureEmbedder.forward(x, pos_cols)."""
    size = int(b.shape[0])
    n_feat = 2 * size
    P = len(pos_cols)
    F = x.shape[-1]
    orig_shape = x.shape
    x32 = x.astype(jnp.float32)
    b32 = b.astype(jnp.float32)

    if P == 0:
        return x32

    for p in pos_cols:
        if p + 1 >= F:
            raise ValueError(f"pos_col {p} requires column {p + 1} < {F}")

    pos_idx = jnp.asarray([[p, p + 1] for p in pos_cols], dtype=jnp.int32)  # (P, 2)
    # gather + flatten (plain-JAX glue): x[..., pairs] -> (..., P, 2) -> (M, 2)
    to_embed = jnp.take(x32, pos_idx, axis=-1).reshape(-1, 2)
    M = to_embed.shape[0]

    packable = (128 % n_feat == 0)
    if use_pallas is None:
        # below this the pallas_call launch + wrapper glue dominates wall time
        use_pallas = packable and (M * n_feat >= (1 << 15))
    if use_pallas and not packable:
        # TODO(synk): the lane-packed layout requires n_feat | 128; other sizes
        # fall back to the exact pure-JAX path.
        use_pallas = False

    if not use_pallas:
        # small-M fast path: pure JAX, exact f32 elementwise (no matmul rounding)
        proj = (2.0 * math.pi) * (
            to_embed[:, 0:1] * b32[None, :, 0] + to_embed[:, 1:2] * b32[None, :, 1]
        )                                                                   # (M, size)
        feats = jnp.stack([jnp.sin(proj), jnp.cos(proj)], axis=-1).reshape(M, n_feat)
    else:
        G = 128 // n_feat

        # ---- constants: fold 2*pi scale, sample selection and sin/cos phase ----
        coef = b32 * (2.0 * math.pi)                        # (size, 2)
        c = jnp.repeat(coef, 2, axis=0)                     # (n_feat, 2)
        lanes = jnp.arange(128)
        f_of_l = lanes % n_feat                             # feature per lane
        g_of_l = lanes // n_feat                            # in-row sample per lane
        rows = jnp.arange(2 * G)
        sel = (g_of_l[None, :] == (rows // 2)[:, None]).astype(jnp.float32)   # (2G,128)
        w = sel * c[f_of_l[None, :], (rows % 2)[:, None]]                     # (2G,128)
        phase = ((f_of_l % 2).astype(jnp.float32) * (0.5 * math.pi))[None, :]  # (1,128)

        # ---- tile sizing: big, VMEM-bounded, balanced, grid >= 2 when possible ----
        # per output row: double-buffered in+out blocks + ~2 f32 intermediates
        per_row_vmem = 2 * (128 + 2 * G) * 4 + 2 * 128 * 4
        vmem_budget = 12 * 1024 * 1024          # stay under the 16 MiB v5e default
        tr_cap = max(8, (vmem_budget // per_row_vmem) // 8 * 8)
        tr_target = max(8, min(_round_up(int(tile_rows), 8), tr_cap))

        R = _cdiv(M, G)                         # output rows actually needed
        R8 = _round_up(R, 8)
        num_steps = max(1, _cdiv(R8, tr_target))
        if num_steps == 1 and R8 >= 16:
            num_steps = 2                       # keep both v7x TensorCores busy
        TR = _round_up(_cdiv(R8, num_steps), 8)
        R_pad = TR * num_steps
        Mp = R_pad * G

        te = jnp.pad(to_embed, ((0, Mp - M), (0, 0))).reshape(R_pad, 2 * G)

        cost = pl.CostEstimate(
            flops=6 * Mp * n_feat,
            transcendentals=Mp * n_feat,
            bytes_accessed=Mp * 2 * 4 + Mp * n_feat * 4,
        )

        out = pl.pallas_call(
            _fourier_kernel,
            out_shape=jax.ShapeDtypeStruct((R_pad, 128), jnp.float32),
            grid=(num_steps,),
            in_specs=[
                pl.BlockSpec((2 * G, 128), lambda i: (0, 0)),   # tiny coef matrix
                pl.BlockSpec((1, 128), lambda i: (0, 0)),       # phase row
                pl.BlockSpec((TR, 2 * G), lambda i: (i, 0)),    # packed coords
            ],
            out_specs=pl.BlockSpec((TR, 128), lambda i: (i, 0)),
            compiler_params=pltpu.CompilerParams(
                dimension_semantics=("parallel",),
            ),
            cost_estimate=cost,
        )(w, phase, te)

        # (R_pad, 128) row-major is bit-identical to (Mp, n_feat) row-major:
        # a free reshape + row slice replaces the old transpose.
        feats = out.reshape(Mp, n_feat)[:M]

    # TODO(synk): the final concatenate is plain-JAX layout plumbing (one extra
    # HBM pass over x and the features); fusing it would require the kernel grid
    # to walk batch rows of x directly and is deferred.
    feats_in_shape = feats.reshape(orig_shape[:-1] + (P * n_feat,))
    return jnp.concatenate([x32, feats_in_shape], axis=-1)


def _reference(x, b, pos_cols):
    """Pure-JAX transcription of the torch forward (exact f32, for verification)."""
    pos_idx = jnp.asarray([[p, p + 1] for p in pos_cols], dtype=jnp.int32)
    orig_shape = x.shape
    x32 = x.astype(jnp.float32)
    b32 = b.astype(jnp.float32)
    to_embed = jnp.take(x32, pos_idx, axis=-1).reshape(-1, 2)
    proj = (2.0 * math.pi) * (
        to_embed[:, 0:1] * b32[None, :, 0] + to_embed[:, 1:2] * b32[None, :, 1]
    )                                                                       # (M, size)
    feats = jnp.stack([jnp.sin(proj), jnp.cos(proj)], axis=-1).reshape(
        to_embed.shape[0], -1
    )
    feats = feats.reshape(orig_shape[:-1] + (-1,))
    return jnp.concatenate([x32, feats], axis=-1)


if __name__ == "__main__":
    key = jax.random.PRNGKey(0)
    kb, kx, kx2 = jax.random.split(key, 3)

    size, sigma = 4, 1.0
    b = jax.random.normal(kb, (size, 2), dtype=jnp.float32) * sigma   # nn.Parameter b

    # small example consistent with the module: feature-last input, pair columns
    x = jax.random.normal(kx, (2, 8, 16), dtype=jnp.float32)
    pos_cols = (0, 4, 8)  # -> pairs (0,1), (4,5), (8,9)

    ref = _reference(x, b, pos_cols)

    # force the Pallas path at this small size so the kernel is exercised on TPU
    out = jax.block_until_ready(fourier_feature_embed(x, b, pos_cols, use_pallas=True))
    assert out.shape == (2, 8, 16 + len(pos_cols) * 2 * size), out.shape
    # cos computed as sin(x + pi/2) on the MXU path: allow a few extra ULP
    assert jnp.allclose(out, ref, atol=1e-4, rtol=1e-4), "mismatch vs reference"

    # slightly larger case exercises the multi-step grid / balanced-tile logic
    x2 = jax.random.normal(kx2, (4, 64, 16), dtype=jnp.float32)
    pos_cols2 = (0, 2, 4, 6)
    ref2 = _reference(x2, b, pos_cols2)
    out2 = jax.block_until_ready(
        fourier_feature_embed(x2, b, pos_cols2, use_pallas=True)
    )
    assert out2.shape == (4, 64, 16 + len(pos_cols2) * 2 * size), out2.shape
    assert jnp.allclose(out2, ref2, atol=1e-4, rtol=1e-4), "mismatch (multi-tile)"

    # auto-dispatch (small M -> pure-JAX fast path) also matches
    out_small = jax.block_until_ready(fourier_feature_embed(x, b, pos_cols))
    assert jnp.allclose(out_small, ref, atol=1e-5, rtol=1e-5), "fast path mismatch"

    print("KERNEL_OK")
</pallas_src>

<mosaic_0001>
module attributes {stable_mosaic.version = 11 : i64} {
  func.func @_fourier_kernel(%arg0: i32, %arg1: memref<32x128xf32, #tpu.memory_space<vmem>>, %arg2: memref<1x128xf32, #tpu.memory_space<vmem>>, %arg3: memref<8x32xf32, #tpu.memory_space<vmem>>, %arg4: memref<8x128xf32, #tpu.memory_space<vmem>>) attributes {dimension_semantics = [#tpu.dimension_semantics<parallel>], iteration_bounds = array<i64: 1>, scalar_prefetch = 0 : i64, scratch_operands = 0 : i64, tpu.core_type = #tpu.core_type<tc>, window_params = [{pipeline_mode = #tpu.pipeline_mode<synchronous>, transform_indices = @transform_0, window_bounds = array<i64: 32, 128>}, {pipeline_mode = #tpu.pipeline_mode<synchronous>, transform_indices = @transform_1, window_bounds = array<i64: 1, 128>}, {transform_indices = @transform_2, window_bounds = array<i64: 8, 32>}, {transform_indices = @transform_3, window_bounds = array<i64: 8, 128>}]} {
    %c0 = arith.constant 0 : index
    %c0_0 = arith.constant 0 : index
    %0 = vector.load %arg3[%c0, %c0_0] : memref<8x32xf32, #tpu.memory_space<vmem>>, vector<8x32xf32>
    %c0_1 = arith.constant 0 : index
    %c0_2 = arith.constant 0 : index
    %1 = vector.load %arg1[%c0_1, %c0_2] : memref<32x128xf32, #tpu.memory_space<vmem>>, vector<32x128xf32>
    %cst = arith.constant dense<0.000000e+00> : vector<8x128xf32>
    %2 = tpu.matmul %0, %1, %cst {dimension_numbers = #tpu.dot_dimension_numbers<[1], [0], [0], [1], [0, 0, 1, 1], [], []>, precision = #tpu.contract_precision<fp32>} : vector<8x32xf32>, vector<32x128xf32>, vector<8x128xf32> -> vector<8x128xf32>
    %c0_3 = arith.constant 0 : index
    %c0_4 = arith.constant 0 : index
    %3 = vector.load %arg2[%c0_3, %c0_4] : memref<1x128xf32, #tpu.memory_space<vmem>>, vector<1x128xf32>
    %4 = vector.broadcast %3 : vector<1x128xf32> to vector<8x128xf32>
    %5 = arith.addf %2, %4 : vector<8x128xf32>
    %6 = math.sin %5 : vector<8x128xf32>
    %c0_5 = arith.constant 0 : index
    %c0_6 = arith.constant 0 : index
    %7 = vector.load %arg4[%c0_5, %c0_6] : memref<8x128xf32, #tpu.memory_space<vmem>>, vector<8x128xf32>
    tpu.vector_store %arg4[%c0_5, %c0_6], %6 {strides = array<i32>} : memref<8x128xf32, #tpu.memory_space<vmem>>, vector<8x128xf32>,
    return
  }
  func.func @transform_0(%arg0: i32) -> (i32, i32) {
    %c0_i32 = arith.constant 0 : i32
    %c0_i32_0 = arith.constant 0 : i32
    %c0_i32_1 = arith.constant 0 : i32
    return %c0_i32, %c0_i32_0 : i32, i32
  }
  func.func @transform_1(%arg0: i32) -> (i32, i32) {
    %c0_i32 = arith.constant 0 : i32
    %c0_i32_0 = arith.constant 0 : i32
    %c0_i32_1 = arith.constant 0 : i32
    return %c0_i32, %c0_i32_0 : i32, i32
  }
  func.func @transform_2(%arg0: i32) -> (i32, i32) {
    %c0_i32 = arith.constant 0 : i32
    %c0_i32_0 = arith.constant 0 : i32
    return %arg0, %c0_i32 : i32, i32
  }
  func.func @transform_3(%arg0: i32) -> (i32, i32) {
    %c0_i32 = arith.constant 0 : i32
    %c0_i32_0 = arith.constant 0 : i32
    return %arg0, %c0_i32 : i32, i32
  }
}

</mosaic_0001>

<llo_original>
// kernel: tpu_custom_call.1
$region0: #{tpu_custom_call.1}
  #allocation0 [shape = 'u32[]', space=smem, size = 0x4, offset = 0x4, fixed_abs, tag = 'smem constant byte address 0x4 - core index']
  #allocation1 [shape = 'u32[144,128]{1,0:T(1,128)}', space=vmem, size = 0x12000, scoped, tag = 'internal scratch']
  %s0 = inlined_call_operand.hbm [shape: f32[32,128], index: 0, kind: input, shape index: {}]
  %s1 = inlined_call_operand.vmem [shape: f32[1,128], index: 1, kind: input, shape index: {}]
  %s2 = inlined_call_operand.hbm [shape: f32[8,32], index: 2, kind: input, shape index: {}]
  %s3 = inlined_call_operand.hbm [shape: f32[8,128], index: 3, kind: output, shape index: {}]
  %s4 = sld [smem:[#allocation0]]
  $region30: #{tpu_custom_call.1} parent=0
    _
  %s6 = ssub.s32 1, %s4
  %s7 = scalar_select 0, %s6, %s4
  $region1: #{tpu_custom_call.1} parent=0
    #allocation2 [shape = 'u8[16384]{0}', space=vmem, size = 0x4000, scoped, tag = 'input window, operand 0, single buffered']
    #allocation3 [shape = 's32[1]{0}', space=sflag, size = 0x4, scoped, tag = 'scoped memory for tpu_custom_call.1']
    #allocation4 [shape = 's32[1]{0}', space=sflag, size = 0x4, scoped, tag = 'scoped memory for tpu_custom_call.1']
    #allocation5 [shape = 'u8[4096]{0}', space=vmem, size = 0x1000, scoped, tag = 'input window, operand 2, single buffered']
    #allocation6 [shape = 's32[1]{0}', space=sflag, size = 0x4, scoped, tag = 'scoped memory for tpu_custom_call.1']
    #allocation7 [shape = 'u8[4096]{0}', space=vmem, size = 0x1000, scoped, tag = 'output window, operand 0, single buffered']
    %8 = vsyncpa [#allocation3], 0
    %9 = vsyncpa [#allocation6], 0
    %10 = vsyncpa [#allocation4], 0
    // Predicated region
    $region2: #{tpu_custom_call.1} parent=1 // pred_check
      _
    $region3: #{tpu_custom_call.1} parent=1 // pred_check_branch
      %12 = sbr.rel (0) target = $region5
    $region4: #{tpu_custom_call.1} parent=1 // pred_region
      %s14 = ssub.s32 512, 512
      %15 = vsyncadd [#allocation3], %s14
      %s16 = sshll.u32 [#allocation2], 4
      %s17 = int_to_ptr.vmem [resolvable:$true] %s16
      %22 = dma.hbm_to_vmem [thread:$0]  %s0, 512, %s17, [#allocation3], 128, 128, 8
    $region5: #{tpu_custom_call.1} parent=1 // pred_fallthru
      _
    // Predicated region
    $region6: #{tpu_custom_call.1} parent=1 // pred_check
      _
    $region7: #{tpu_custom_call.1} parent=1 // pred_check_branch
      %24 = sbr.rel (0) target = $region9
    $region8: #{tpu_custom_call.1} parent=1 // pred_region
      _
    $region9: #{tpu_custom_call.1} parent=1 // pred_fallthru
      _
    // Predicated region
    $region10: #{tpu_custom_call.1} parent=1 // pred_check
      _
    $region11: #{tpu_custom_call.1} parent=1 // pred_check_branch
      %26 = sbr.rel (0) target = $region13
    $region12: #{tpu_custom_call.1} parent=1 // pred_region
      %s28 = ssub.s32 128, 128
      %29 = vsyncadd [#allocation6], %s28
      %s31 = sshll.u32 [#allocation5], 4
      %s32 = int_to_ptr.vmem [resolvable:$true] %s31
      %34 = dma.hbm_to_vmem [thread:$0]  %s2, 128, %s32, [#allocation6]
    $region13: #{tpu_custom_call.1} parent=1 // pred_fallthru
      _
    // Predicated region
    $region14: #{tpu_custom_call.1} parent=1 // pred_check
      _
    $region15: #{tpu_custom_call.1} parent=1 // pred_check_branch
      %36 = sbr.rel (0) target = $region17
    $region16: #{tpu_custom_call.1} parent=1 // pred_region
      %37 = dma.done [#allocation3], 512
    $region17: #{tpu_custom_call.1} parent=1 // pred_fallthru
      _
    // Predicated region
    $region18: #{tpu_custom_call.1} parent=1 // pred_check
      _
    $region19: #{tpu_custom_call.1} parent=1 // pred_check_branch
      %39 = sbr.rel (0) target = $region21
    $region20: #{tpu_custom_call.1} parent=1 // pred_region
      %40 = dma.done [#allocation6], 128
    $region21: #{tpu_custom_call.1} parent=1 // pred_fallthru
      _
    %v41 = vld [vmem:[#allocation5] sm:$0xff]
    %v42 = vld [vmem:[#allocation2] sm:$0xff]
    %v43 = vld [vmem:[#allocation2 + $0x8] sm:$0xff]
    %v44 = vld [vmem:[#allocation2 + $0x10] sm:$0xff]
    %v45 = vld [vmem:[#allocation2 + $0x18] sm:$0xff]
    %v46 = vld [vmem:[%s1] sm:$0x1]
    %v48 = vlaneseq
    %v49 = vshrl.u32 %v48, 7
    %v50 = vsub.s32 0, %v49
    %v51 = vrot.slane %v46, %v50
    %vm53 = vcmask 261120
    %v55 = vsel %vm53, %v41, 0
    %57 = vmatprep.subr.mxu0 0.0
    %58 = vmatpush1.msra.mxu0 0.0
    %59 = vmatprep.subr.mxu0 0.0
    %60 = vmatpush1.msra.mxu0 0.0
    %61 = vmatprep.subr.mxu0 0.0
    %62 = vmatpush1.msra.mxu0 0.0
    %63 = vmatprep.subr.mxu0 0.0
    %64 = vmatpush1.msra.mxu0 0.0
    %65 = vmatprep.subr.mxu0 0.0
    %66 = vmatpush1.msra.mxu0 0.0
    %67 = vmatprep.subr.mxu0 0.0
    %68 = vmatpush1.msra.mxu0 0.0
    %69 = vmatprep.subr.mxu0 0.0
    %70 = vmatpush1.msra.mxu0 0.0
    %71 = vmatprep.subr.mxu0 0.0
    %72 = vmatpush1.msra.mxu0 0.0
    %73 = vmatprep.subr.mxu0 0.0
    %74 = vmatpush1.msra.mxu0 0.0
    %75 = vmatprep.subr.mxu0 0.0
    %76 = vmatpush1.msra.mxu0 0.0
    %77 = vmatprep.subr.mxu0 0.0
    %78 = vmatpush1.msra.mxu0 0.0
    %79 = vmatprep.subr.mxu0 0.0
    %80 = vmatpush1.msra.mxu0 0.0
    %81 = vmatprep.subr.mxu0 0.0
    %v82 = vand.u32 %v45, 4294901760
    %83 = vmatpush1.msra.mxu0 %v82
    %84 = vmatprep.subr.mxu0 0.0
    %v85 = vand.u32 %v44, 4294901760
    %86 = vmatpush1.msra.mxu0 %v85
    %87 = vmatprep.subr.mxu0 0.0
    %v88 = vand.u32 %v43, 4294901760
    %89 = vmatpush1.msra.mxu0 %v88
    %90 = vmatprep.subr.mxu0 0.0
    %v91 = vand.u32 %v42, 4294901760
    %92 = vmatpush1.msra.mxu0 %v91
    %93 = vmatprep.subr.mxu0 0.0
    %94 = vmatpush2.msra.mxu0 0.0
    %95 = vmatprep.subr.mxu0 0.0
    %96 = vmatpush2.msra.mxu0 0.0
    %97 = vmatprep.subr.mxu0 0.0
    %98 = vmatpush2.msra.mxu0 0.0
    %99 = vmatprep.subr.mxu0 0.0
    %100 = vmatpush2.msra.mxu0 0.0
    %101 = vmatprep.subr.mxu0 0.0
    %102 = vmatpush2.msra.mxu0 0.0
    %103 = vmatprep.subr.mxu0 0.0
    %104 = vmatpush2.msra.mxu0 0.0
    %105 = vmatprep.subr.mxu0 0.0
    %106 = vmatpush2.msra.mxu0 0.0
    %107 = vmatprep.subr.mxu0 0.0
    %108 = vmatpush2.msra.mxu0 0.0
    %109 = vmatprep.subr.mxu0 0.0
    %110 = vmatpush2.msra.mxu0 0.0
    %111 = vmatprep.subr.mxu0 0.0
    %112 = vmatpush2.msra.mxu0 0.0
    %113 = vmatprep.subr.mxu0 0.0
    %114 = vmatpush2.msra.mxu0 0.0
    %115 = vmatprep.subr.mxu0 0.0
    %116 = vmatpush2.msra.mxu0 0.0
    %117 = vmatprep.subr.mxu0 0.0
    %118 = vmatpush2.msra.mxu0 0.0
    %119 = vmatprep.subr.mxu0 0.0
    %120 = vmatpush2.msra.mxu0 0.0
    %121 = vmatprep.subr.mxu0 0.0
    %122 = vmatpush2.msra.mxu0 0.0
    %123 = vmatprep.subr.mxu0 0.0
    %124 = vmatpush2.msra.mxu0 0.0
    %125 = vmatprep.mubr.f32.mxu0 0.0
    %v126 = vand.u32 %v55, 4294901760
    %v127 = vsub.f32 %v55, %v126
    %v128 = vand.u32 %v127, 4294901760
    %v129 = vsub.f32 %v127, %v128
    %v130 = vand.u32 %v129, 4294901760
    %131 = vmatmul.mubr.f32.gmra.mxu0 %v130
    %v132 = vpop.f32.mrf.mxu0
    %v133 = vadd.f32 %v51, %v132
    %v134 = vpop.f32.mrf.mxu0
    %135 = vdwg.mxu0
    %136 = vmatprep.subr.mxu0 0.0
    %137 = vmatpush1.msra.mxu0 0.0
    %138 = vmatprep.subr.mxu0 0.0
    %139 = vmatpush1.msra.mxu0 0.0
    %140 = vmatprep.subr.mxu0 0.0
    %141 = vmatpush1.msra.mxu0 0.0
    %142 = vmatprep.subr.mxu0 0.0
    %143 = vmatpush1.msra.mxu0 0.0
    %144 = vmatprep.subr.mxu0 0.0
    %145 = vmatpush1.msra.mxu0 0.0
    %146 = vmatprep.subr.mxu0 0.0
    %147 = vmatpush1.msra.mxu0 0.0
    %148 = vmatprep.subr.mxu0 0.0
    %149 = vmatpush1.msra.mxu0 0.0
    %150 = vmatprep.subr.mxu0 0.0
    %151 = vmatpush1.msra.mxu0 0.0
    %152 = vmatprep.subr.mxu0 0.0
    %153 = vmatpush1.msra.mxu0 0.0
    %154 = vmatprep.subr.mxu0 0.0
    %155 = vmatpush1.msra.mxu0 0.0
    %156 = vmatprep.subr.mxu0 0.0
    %157 = vmatpush1.msra.mxu0 0.0
    %158 = vmatprep.subr.mxu0 0.0
    %159 = vmatpush1.msra.mxu0 0.0
    %160 = vmatprep.subr.mxu0 0.0
    %v161 = vand.u32 %v45, 4294901760
    %v162 = vsub.f32 %v45, %v161
    %v163 = vand.u32 %v162, 4294901760
    %v164 = vsub.f32 %v162, %v163
    %v165 = vand.u32 %v164, 4294901760
    %166 = vmatpush1.msra.mxu0 %v165
    %167 = vmatprep.subr.mxu0 0.0
    %v168 = vand.u32 %v44, 4294901760
    %v169 = vsub.f32 %v44, %v168
    %v170 = vand.u32 %v169, 4294901760
    %v171 = vsub.f32 %v169, %v170
    %v172 = vand.u32 %v171, 4294901760
    %173 = vmatpush1.msra.mxu0 %v172
    %174 = vmatprep.subr.mxu0 0.0
    %v175 = vand.u32 %v43, 4294901760
    %v176 = vsub.f32 %v43, %v175
    %v177 = vand.u32 %v176, 4294901760
    %v178 = vsub.f32 %v176, %v177
    %v179 = vand.u32 %v178, 4294901760
    %180 = vmatpush1.msra.mxu0 %v179
    %181 = vmatprep.subr.mxu0 0.0
    %v182 = vand.u32 %v42, 4294901760
    %v183 = vsub.f32 %v42, %v182
    %v184 = vand.u32 %v183, 4294901760
    %v185 = vsub.f32 %v183, %v184
    %v186 = vand.u32 %v185, 4294901760
    %187 = vmatpush1.msra.mxu0 %v186
    %188 = vmatprep.subr.mxu0 0.0
    %189 = vmatpush2.msra.mxu0 0.0
    %190 = vmatprep.subr.mxu0 0.0
    %191 = vmatpush2.msra.mxu0 0.0
    %192 = vmatprep.subr.mxu0 0.0
    %193 = vmatpush2.msra.mxu0 0.0
    %194 = vmatprep.subr.mxu0 0.0
    %195 = vmatpush2.msra.mxu0 0.0
    %196 = vmatprep.subr.mxu0 0.0
    %197 = vmatpush2.msra.mxu0 0.0
    %198 = vmatprep.subr.mxu0 0.0
    %199 = vmatpush2.msra.mxu0 0.0
    %200 = vmatprep.subr.mxu0 0.0
    %201 = vmatpush2.msra.mxu0 0.0
    %202 = vmatprep.subr.mxu0 0.0
    %203 = vmatpush2.msra.mxu0 0.0
    %204 = vmatprep.subr.mxu0 0.0
    %205 = vmatpush2.msra.mxu0 0.0
    %206 = vmatprep.subr.mxu0 0.0
    %207 = vmatpush2.msra.mxu0 0.0
    %208 = vmatprep.subr.mxu0 0.0
    %209 = vmatpush2.msra.mxu0 0.0
    %210 = vmatprep.subr.mxu0 0.0
    %211 = vmatpush2.msra.mxu0 0.0
    %212 = vmatprep.subr.mxu0 0.0
    %213 = vmatpush2.msra.mxu0 0.0
    %214 = vmatprep.subr.mxu0 0.0
    %215 = vmatpush2.msra.mxu0 0.0
    %216 = vmatprep.subr.mxu0 0.0
    %217 = vmatpush2.msra.mxu0 0.0
    %218 = vmatprep.subr.mxu0 0.0
    %219 = vmatpush2.msra.mxu0 0.0
    %220 = vmatprep.mubr.f32.mxu0 0.0
    %v221 = vand.u32 %v55, 4294901760
    %222 = vmatmul.mubr.f32.gmra.mxu0 %v221
    %v223 = vpop.f32.mrf.mxu0
    %v224 = vadd.f32 %v133, %v223
    %v225 = vpop.f32.mrf.mxu0
    %226 = vdwg.mxu0
    %227 = vmatprep.subr.mxu0 0.0
    %228 = vmatpush1.msra.mxu0 0.0
    %229 = vmatprep.subr.mxu0 0.0
    %230 = vmatpush1.msra.mxu0 0.0
    %231 = vmatprep.subr.mxu0 0.0
    %232 = vmatpush1.msra.mxu0 0.0
    %233 = vmatprep.subr.mxu0 0.0
    %234 = vmatpush1.msra.mxu0 0.0
    %235 = vmatprep.subr.mxu0 0.0
    %236 = vmatpush1.msra.mxu0 0.0
    %237 = vmatprep.subr.mxu0 0.0
    %238 = vmatpush1.msra.mxu0 0.0
    %239 = vmatprep.subr.mxu0 0.0
    %240 = vmatpush1.msra.mxu0 0.0
    %241 = vmatprep.subr.mxu0 0.0
    %242 = vmatpush1.msra.mxu0 0.0
    %243 = vmatprep.subr.mxu0 0.0
    %244 = vmatpush1.msra.mxu0 0.0
    %245 = vmatprep.subr.mxu0 0.0
    %246 = vmatpush1.msra.mxu0 0.0
    %247 = vmatprep.subr.mxu0 0.0
    %248 = vmatpush1.msra.mxu0 0.0
    %249 = vmatprep.subr.mxu0 0.0
    %250 = vmatpush1.msra.mxu0 0.0
    %251 = vmatprep.subr.mxu0 0.0
    %v252 = vand.u32 %v45, 4294901760
    %v253 = vsub.f32 %v45, %v252
    %254 = vmatpush1.msra.mxu0 %v253
    %255 = vmatprep.subr.mxu0 0.0
    %v256 = vand.u32 %v44, 4294901760
    %v257 = vsub.f32 %v44, %v256
    %258 = vmatpush1.msra.mxu0 %v257
    %259 = vmatprep.subr.mxu0 0.0
    %v260 = vand.u32 %v43, 4294901760
    %v261 = vsub.f32 %v43, %v260
    %262 = vmatpush1.msra.mxu0 %v261
    %263 = vmatprep.subr.mxu0 0.0
    %v264 = vand.u32 %v42, 4294901760
    %v265 = vsub.f32 %v42, %v264
    %266 = vmatpush1.msra.mxu0 %v265
    %267 = vmatprep.subr.mxu0 0.0
    %268 = vmatpush2.msra.mxu0 0.0
    %269 = vmatprep.subr.mxu0 0.0
    %270 = vmatpush2.msra.mxu0 0.0
    %271 = vmatprep.subr.mxu0 0.0
    %272 = vmatpush2.msra.mxu0 0.0
    %273 = vmatprep.subr.mxu0 0.0
    %274 = vmatpush2.msra.mxu0 0.0
    %275 = vmatprep.subr.mxu0 0.0
    %276 = vmatpush2.msra.mxu0 0.0
    %277 = vmatprep.subr.mxu0 0.0
    %278 = vmatpush2.msra.mxu0 0.0
    %279 = vmatprep.subr.mxu0 0.0
    %280 = vmatpush2.msra.mxu0 0.0
    %281 = vmatprep.subr.mxu0 0.0
    %282 = vmatpush2.msra.mxu0 0.0
    %283 = vmatprep.subr.mxu0 0.0
    %284 = vmatpush2.msra.mxu0 0.0
    %285 = vmatprep.subr.mxu0 0.0
    %286 = vmatpush2.msra.mxu0 0.0
    %287 = vmatprep.subr.mxu0 0.0
    %288 = vmatpush2.msra.mxu0 0.0
    %289 = vmatprep.subr.mxu0 0.0
    %290 = vmatpush2.msra.mxu0 0.0
    %291 = vmatprep.subr.mxu0 0.0
    %292 = vmatpush2.msra.mxu0 0.0
    %293 = vmatprep.subr.mxu0 0.0
    %294 = vmatpush2.msra.mxu0 0.0
    %295 = vmatprep.subr.mxu0 0.0
    %296 = vmatpush2.msra.mxu0 0.0
    %297 = vmatprep.subr.mxu0 0.0
    %298 = vmatpush2.msra.mxu0 0.0
    %299 = vmatprep.mubr.f32.mxu0 0.0
    %v300 = vand.u32 %v55, 4294901760
    %v301 = vsub.f32 %v55, %v300
    %302 = vmatmul.mubr.f32.gmra.mxu0 %v301
    %v303 = vpop.f32.mrf.mxu0
    %v304 = vadd.f32 %v224, %v303
    %v305 = vpop.f32.mrf.mxu0
    %306 = vdwg.mxu0
    %307 = vmatprep.subr.mxu0 0.0
    %308 = vmatpush1.msra.mxu0 0.0
    %309 = vmatprep.subr.mxu0 0.0
    %310 = vmatpush1.msra.mxu0 0.0
    %311 = vmatprep.subr.mxu0 0.0
    %312 = vmatpush1.msra.mxu0 0.0
    %313 = vmatprep.subr.mxu0 0.0
    %314 = vmatpush1.msra.mxu0 0.0
    %315 = vmatprep.subr.mxu0 0.0
    %316 = vmatpush1.msra.mxu0 0.0
    %317 = vmatprep.subr.mxu0 0.0
    %318 = vmatpush1.msra.mxu0 0.0
    %319 = vmatprep.subr.mxu0 0.0
    %320 = vmatpush1.msra.mxu0 0.0
    %321 = vmatprep.subr.mxu0 0.0
    %322 = vmatpush1.msra.mxu0 0.0
    %323 = vmatprep.subr.mxu0 0.0
    %324 = vmatpush1.msra.mxu0 0.0
    %325 = vmatprep.subr.mxu0 0.0
    %326 = vmatpush1.msra.mxu0 0.0
    %327 = vmatprep.subr.mxu0 0.0
    %328 = vmatpush1.msra.mxu0 0.0
    %329 = vmatprep.subr.mxu0 0.0
    %330 = vmatpush1.msra.mxu0 0.0
    %331 = vmatprep.subr.mxu0 0.0
    %v332 = vand.u32 %v45, 4294901760
    %333 = vmatpush1.msra.mxu0 %v332
    %334 = vmatprep.subr.mxu0 0.0
    %v335 = vand.u32 %v44, 4294901760
    %336 = vmatpush1.msra.mxu0 %v335
    %337 = vmatprep.subr.mxu0 0.0
    %v338 = vand.u32 %v43, 4294901760
    %339 = vmatpush1.msra.mxu0 %v338
    %340 = vmatprep.subr.mxu0 0.0
    %v341 = vand.u32 %v42, 4294901760
    %342 = vmatpush1.msra.mxu0 %v341
    %343 = vmatprep.subr.mxu0 0.0
    %344 = vmatpush2.msra.mxu0 0.0
    %345 = vmatprep.subr.mxu0 0.0
    %346 = vmatpush2.msra.mxu0 0.0
    %347 = vmatprep.subr.mxu0 0.0
    %348 = vmatpush2.msra.mxu0 0.0
    %349 = vmatprep.subr.mxu0 0.0
    %350 = vmatpush2.msra.mxu0 0.0
    %351 = vmatprep.subr.mxu0 0.0
    %352 = vmatpush2.msra.mxu0 0.0
    %353 = vmatprep.subr.mxu0 0.0
    %354 = vmatpush2.msra.mxu0 0.0
    %355 = vmatprep.subr.mxu0 0.0
    %356 = vmatpush2.msra.mxu0 0.0
    %357 = vmatprep.subr.mxu0 0.0
    %358 = vmatpush2.msra.mxu0 0.0
    %359 = vmatprep.subr.mxu0 0.0
    %360 = vmatpush2.msra.mxu0 0.0
    %361 = vmatprep.subr.mxu0 0.0
    %362 = vmatpush2.msra.mxu0 0.0
    %363 = vmatprep.subr.mxu0 0.0
    %364 = vmatpush2.msra.mxu0 0.0
    %365 = vmatprep.subr.mxu0 0.0
    %366 = vmatpush2.msra.mxu0 0.0
    %367 = vmatprep.subr.mxu0 0.0
    %368 = vmatpush2.msra.mxu0 0.0
    %369 = vmatprep.subr.mxu0 0.0
    %370 = vmatpush2.msra.mxu0 0.0
    %371 = vmatprep.subr.mxu0 0.0
    %372 = vmatpush2.msra.mxu0 0.0
    %373 = vmatprep.subr.mxu0 0.0
    %374 = vmatpush2.msra.mxu0 0.0
    %375 = vmatprep.mubr.f32.mxu0 0.0
    %v376 = vand.u32 %v55, 4294901760
    %v377 = vsub.f32 %v55, %v376
    %v378 = vand.u32 %v377, 4294901760
    %379 = vmatmul.mubr.f32.gmra.mxu0 %v378
    %v380 = vpop.f32.mrf.mxu0
    %v381 = vadd.f32 %v304, %v380
    %v382 = vpop.f32.mrf.mxu0
    %383 = vdwg.mxu0
    %384 = vmatprep.subr.mxu0 0.0
    %385 = vmatpush1.msra.mxu0 0.0
    %386 = vmatprep.subr.mxu0 0.0
    %387 = vmatpush1.msra.mxu0 0.0
    %388 = vmatprep.subr.mxu0 0.0
    %389 = vmatpush1.msra.mxu0 0.0
    %390 = vmatprep.subr.mxu0 0.0
    %391 = vmatpush1.msra.mxu0 0.0
    %392 = vmatprep.subr.mxu0 0.0
    %393 = vmatpush1.msra.mxu0 0.0
    %394 = vmatprep.subr.mxu0 0.0
    %395 = vmatpush1.msra.mxu0 0.0
    %396 = vmatprep.subr.mxu0 0.0
    %397 = vmatpush1.msra.mxu0 0.0
    %398 = vmatprep.subr.mxu0 0.0
    %399 = vmatpush1.msra.mxu0 0.0
    %400 = vmatprep.subr.mxu0 0.0
    %401 = vmatpush1.msra.mxu0 0.0
    %402 = vmatprep.subr.mxu0 0.0
    %403 = vmatpush1.msra.mxu0 0.0
    %404 = vmatprep.subr.mxu0 0.0
    %405 = vmatpush1.msra.mxu0 0.0
    %406 = vmatprep.subr.mxu0 0.0
    %407 = vmatpush1.msra.mxu0 0.0
    %408 = vmatprep.subr.mxu0 0.0
    %v409 = vand.u32 %v45, 4294901760
    %v410 = vsub.f32 %v45, %v409
    %v411 = vand.u32 %v410, 4294901760
    %412 = vmatpush1.msra.mxu0 %v411
    %413 = vmatprep.subr.mxu0 0.0
    %v414 = vand.u32 %v44, 4294901760
    %v415 = vsub.f32 %v44, %v414
    %v416 = vand.u32 %v415, 4294901760
    %417 = vmatpush1.msra.mxu0 %v416
    %418 = vmatprep.subr.mxu0 0.0
    %v419 = vand.u32 %v43, 4294901760
    %v420 = vsub.f32 %v43, %v419
    %v421 = vand.u32 %v420, 4294901760
    %422 = vmatpush1.msra.mxu0 %v421
    %423 = vmatprep.subr.mxu0 0.0
    %v424 = vand.u32 %v42, 4294901760
    %v425 = vsub.f32 %v42, %v424
    %v426 = vand.u32 %v425, 4294901760
    %427 = vmatpush1.msra.mxu0 %v426
    %428 = vmatprep.subr.mxu0 0.0
    %429 = vmatpush2.msra.mxu0 0.0
    %430 = vmatprep.subr.mxu0 0.0
    %431 = vmatpush2.msra.mxu0 0.0
    %432 = vmatprep.subr.mxu0 0.0
    %433 = vmatpush2.msra.mxu0 0.0
    %434 = vmatprep.subr.mxu0 0.0
    %435 = vmatpush2.msra.mxu0 0.0
    %436 = vmatprep.subr.mxu0 0.0
    %437 = vmatpush2.msra.mxu0 0.0
    %438 = vmatprep.subr.mxu0 0.0
    %439 = vmatpush2.msra.mxu0 0.0
    %440 = vmatprep.subr.mxu0 0.0
    %441 = vmatpush2.msra.mxu0 0.0
    %442 = vmatprep.subr.mxu0 0.0
    %443 = vmatpush2.msra.mxu0 0.0
    %444 = vmatprep.subr.mxu0 0.0
    %445 = vmatpush2.msra.mxu0 0.0
    %446 = vmatprep.subr.mxu0 0.0
    %447 = vmatpush2.msra.mxu0 0.0
    %448 = vmatprep.subr.mxu0 0.0
    %449 = vmatpush2.msra.mxu0 0.0
    %450 = vmatprep.subr.mxu0 0.0
    %451 = vmatpush2.msra.mxu0 0.0
    %452 = vmatprep.subr.mxu0 0.0
    %453 = vmatpush2.msra.mxu0 0.0
    %454 = vmatprep.subr.mxu0 0.0
    %455 = vmatpush2.msra.mxu0 0.0
    %456 = vmatprep.subr.mxu0 0.0
    %457 = vmatpush2.msra.mxu0 0.0
    %458 = vmatprep.subr.mxu0 0.0
    %459 = vmatpush2.msra.mxu0 0.0
    %460 = vmatprep.mubr.f32.mxu0 0.0
    %v461 = vand.u32 %v55, 4294901760
    %462 = vmatmul.mubr.f32.gmra.mxu0 %v461
    %v463 = vpop.f32.mrf.mxu0
    %v464 = vadd.f32 %v381, %v463
    %v465 = vpop.f32.mrf.mxu0
    %466 = vdwg.mxu0
    %467 = vmatprep.subr.mxu0 0.0
    %468 = vmatpush1.msra.mxu0 0.0
    %469 = vmatprep.subr.mxu0 0.0
    %470 = vmatpush1.msra.mxu0 0.0
    %471 = vmatprep.subr.mxu0 0.0
    %472 = vmatpush1.msra.mxu0 0.0
    %473 = vmatprep.subr.mxu0 0.0
    %474 = vmatpush1.msra.mxu0 0.0
    %475 = vmatprep.subr.mxu0 0.0
    %476 = vmatpush1.msra.mxu0 0.0
    %477 = vmatprep.subr.mxu0 0.0
    %478 = vmatpush1.msra.mxu0 0.0
    %479 = vmatprep.subr.mxu0 0.0
    %480 = vmatpush1.msra.mxu0 0.0
    %481 = vmatprep.subr.mxu0 0.0
    %482 = vmatpush1.msra.mxu0 0.0
    %483 = vmatprep.subr.mxu0 0.0
    %484 = vmatpush1.msra.mxu0 0.0
    %485 = vmatprep.subr.mxu0 0.0
    %486 = vmatpush1.msra.mxu0 0.0
    %487 = vmatprep.subr.mxu0 0.0
    %488 = vmatpush1.msra.mxu0 0.0
    %489 = vmatprep.subr.mxu0 0.0
    %490 = vmatpush1.msra.mxu0 0.0
    %491 = vmatprep.subr.mxu0 0.0
    %v492 = vand.u32 %v45, 4294901760
    %493 = vmatpush1.msra.mxu0 %v492
    %494 = vmatprep.subr.mxu0 0.0
    %v495 = vand.u32 %v44, 4294901760
    %496 = vmatpush1.msra.mxu0 %v495
    %497 = vmatprep.subr.mxu0 0.0
    %v498 = vand.u32 %v43, 4294901760
    %499 = vmatpush1.msra.mxu0 %v498
    %500 = vmatprep.subr.mxu0 0.0
    %v501 = vand.u32 %v42, 4294901760
    %502 = vmatpush1.msra.mxu0 %v501
    %503 = vmatprep.subr.mxu0 0.0
    %504 = vmatpush2.msra.mxu0 0.0
    %505 = vmatprep.subr.mxu0 0.0
    %506 = vmatpush2.msra.mxu0 0.0
    %507 = vmatprep.subr.mxu0 0.0
    %508 = vmatpush2.msra.mxu0 0.0
    %509 = vmatprep.subr.mxu0 0.0
    %510 = vmatpush2.msra.mxu0 0.0
    %511 = vmatprep.subr.mxu0 0.0
    %512 = vmatpush2.msra.mxu0 0.0
    %513 = vmatprep.subr.mxu0 0.0
    %514 = vmatpush2.msra.mxu0 0.0
    %515 = vmatprep.subr.mxu0 0.0
    %516 = vmatpush2.msra.mxu0 0.0
    %517 = vmatprep.subr.mxu0 0.0
    %518 = vmatpush2.msra.mxu0 0.0
    %519 = vmatprep.subr.mxu0 0.0
    %520 = vmatpush2.msra.mxu0 0.0
    %521 = vmatprep.subr.mxu0 0.0
    %522 = vmatpush2.msra.mxu0 0.0
    %523 = vmatprep.subr.mxu0 0.0
    %524 = vmatpush2.msra.mxu0 0.0
    %525 = vmatprep.subr.mxu0 0.0
    %526 = vmatpush2.msra.mxu0 0.0
    %527 = vmatprep.subr.mxu0 0.0
    %528 = vmatpush2.msra.mxu0 0.0
    %529 = vmatprep.subr.mxu0 0.0
    %530 = vmatpush2.msra.mxu0 0.0
    %531 = vmatprep.subr.mxu0 0.0
    %532 = vmatpush2.msra.mxu0 0.0
    %533 = vmatprep.subr.mxu0 0.0
    %534 = vmatpush2.msra.mxu0 0.0
    %535 = vmatprep.mubr.f32.mxu0 0.0
    %v536 = vand.u32 %v55, 4294901760
    %537 = vmatmul.mubr.f32.gmra.mxu0 %v536
    %v538 = vpop.f32.mrf.mxu0
    %v539 = vadd.f32 %v464, %v538
    %v540 = vpop.f32.mrf.mxu0
    %541 = vdwg.mxu0
    %v542 = vand.u32 2147483647, %v539
    %vm543 = vcmp.le.f32.partialorder %v542, 0.7853982
    %vm544 = vcmp.lt.s32.totalorder %v539, 0
    %v545 = vand.u32 %v539, 2139095040
    %v546 = vshrl.u32 %v545, 23
    %v547 = vsub.s32 %v546, 127
    %v548 = vand.u32 2147483647, %v539
    %v549 = vand.u32 %v548, 8388607
    %v550 = vor.u32 %v549, 8388608
    %v551 = vsub.s32 0, %v550
    %v552 = vadd.s32 %v547, 1
    %vm553 = vcmp.gt.s32.totalorder %v552, 0
    %v554 = vsel %vm553, %v552, 0
    %v555 = vshrl.u32 %v554, 5
    %v556 = vand.u32 %v554, 31
    %v557 = vsub.s32 32, %v556
    %v558 = vshrl.u32 683565275, %v557
    %v559 = vshll.u32 683565275, %v556
    %v560 = vshrl.u32 2475754826, %v557
    %v561 = vor.u32 %v559, %v560
    %v562 = vshll.u32 2475754826, %v556
    %v563 = vshrl.u32 2131351028, %v557
    %v564 = vor.u32 %v562, %v563
    %v565 = vshll.u32 2131351028, %v556
    %v566 = vshrl.u32 2102212464, %v557
    %v567 = vor.u32 %v565, %v566
    %v568 = vshll.u32 2102212464, %v556
    %v569 = vshrl.u32 920167782, %v557
    %v570 = vor.u32 %v568, %v569
    %v571 = vshll.u32 920167782, %v556
    %v572 = vshrl.u32 1326507024, %v557
    %v573 = vor.u32 %v571, %v572
    %vm574 = vcmp.lt.s32.totalorder %v555, 1
    %vm575 = vcmp.lt.s32.totalorder %v555, 2
    %vm576 = vcmp.lt.s32.totalorder %v555, 3
    %vm577 = vcmp.lt.s32.totalorder %v555, 4
    %v578 = vsel %vm574, %v558, %v561
    %v579 = vsel %vm577, %v567, 2102212464
    %v580 = vsel %vm576, %v564, %v579
    %v581 = vsel %vm575, %v578, %v580
    %v582 = vsel %vm574, %v561, %v564
    %v583 = vsel %vm577, %v570, 920167782
    %v584 = vsel %vm576, %v567, %v583
    %v585 = vsel %vm575, %v582, %v584
    %v586 = vsel %vm574, %v564, %v567
    %v587 = vsel %vm577, %v573, 1326507024
    %v588 = vsel %vm576, %v570, %v587
    %v589 = vsel %vm575, %v586, %v588
    %v590 = vshll.u32 %v550, 8
    %v591 = vmul.u32.u64.compose %v590, %v589
    %v592 = vextract.low.u32 %v591
    %v593 = vextract.high.u32 %v591
    %v594 = vmul.u32.u64.compose %v590, %v585
    %v595 = vextract.low.u32 %v594
    %v596 = vextract.high.u32 %v594
    %v597 = vmul.u32 %v590, %v581
    %v598 = vadd.s32 %v593, %v595
    %vm599 = vc.u32 %v593, %v595
    %v600 = vadd.s32 %v596, 1
    %v601 = vsel %vm599, %v600, %v596
    %v602 = vadd.s32 %v597, %v601
    %v603 = vadd.s32 %v602, 536870912
    %v604 = vshrl.u32 %v603, 30
    %v605 = vshll.u32 %v604, 30
    %v606 = vsub.s32 %v602, %v605
    %vm607 = vcmp.lt.s32.totalorder %v606, 0
    %v608 = vsub.s32 0, %v606
    %v609 = vsel %vm607, %v608, %v606
    %v610 = vclz %v609
    %v611 = vsub.s32 %v610, 2
    %vm612 = vcmp.gt.s32.totalorder 0, %v611
    %v613 = vsel %vm612, 0, %v611
    %v614 = vsub.s32 32, %v613
    %v615 = vshll.u32 %v606, %v613
    %v616 = vshrl.u32 %v598, %v614
    %v617 = vor.u32 %v615, %v616
    %v618 = vsub.s32 4294967266, %v613
    %v619 = vadd.s32 %v618, 127
    %v620 = vshll.u32 %v619, 23
    %v621 = vor.u32 4788187, %v620
    %v622 = vand.u32 2147483647, %v621
    %v624 = vcvt.s32.f32 %v617
    %v625 = vmul.f32 %v624, %v622
    %v626 = vxor.u32 %v625, 2147483648
    %v627 = vsel %vm544, %v626, %v625
    %v628 = vsub.s32 4, %v604
    %v629 = vsel %vm544, %v628, %v604
    %v630 = vsel %vm543, %v539, %v627
    %v631 = vsel %vm543, 0, %v629
    %v632 = vcosq.f32.pop %v630
    %v633 = vsinq.f32.pop %v630
    %vm634 = vweird.f32 %v539
    %v635 = vadd.s32 %v631, 3
    %v636 = vand.u32 %v635, 3
    %vm637 = vcmp.lt.s32.totalorder %v636, 2
    %vm638 = vcmp.eq.s32.totalorder %v636, 0
    %v639 = vxor.u32 %v633, 2147483648
    %v640 = vsel %vm638, %v632, %v639
    %vm641 = vcmp.eq.s32.totalorder %v636, 2
    %v642 = vxor.u32 %v632, 2147483648
    %v643 = vsel %vm641, %v642, %v633
    %v644 = vsel %vm637, %v640, %v643
    %v645 = vsel %vm634, nan, %v644
    %646 = vst [vmem:[#allocation7] sm:$0xff] %v645
    // Predicated region
    $region22: #{tpu_custom_call.1} parent=1 // pred_check
      _
    $region23: #{tpu_custom_call.1} parent=1 // pred_check_branch
      %648 = sbr.rel (0) target = $region25
    $region24: #{tpu_custom_call.1} parent=1 // pred_region
      %s650 = ssub.s32 128, 128
      %651 = vsyncadd [#allocation4], %s650
      %s653 = sshll.u32 [#allocation7], 4
      %s654 = int_to_ptr.vmem [resolvable:$true] %s653
      %656 = dma.vmem_to_hbm [thread:$0]  %s654, 128, %s3, [#allocation4]
    $region25: #{tpu_custom_call.1} parent=1 // pred_fallthru
      _
    // Predicated region
    $region26: #{tpu_custom_call.1} parent=1 // pred_check
      _
    $region27: #{tpu_custom_call.1} parent=1 // pred_check_branch
      %658 = sbr.rel (0) target = $region29
    $region28: #{tpu_custom_call.1} parent=1 // pred_region
      %659 = dma.done [#allocation4], 128
    $region29: #{tpu_custom_call.1} parent=1 // pred_fallthru
      _
    %660 = vsyncpa [#allocation3], 1
    %661 = vsyncpa [#allocation6], 1
    %662 = vsyncpa [#allocation4], 1

</llo_original>
